<compile_context>
chip_gen: v6e
topology: v6e:2x2x1
jax: 0.10.0
libtpu: 0.0.40
codegen_flags: <defaults>
</compile_context>

<pallas_src>
import functools

import jax
import jax.numpy as jnp
from jax import lax
from jax.experimental import pallas as pl
from jax.experimental.pallas import tpu as pltpu


def _round_up(n, m):
    return ((n + m - 1) // m) * m


def _mlp3_kernel(x_ref, w1_ref, b1_ref, w2_ref, b2_ref, w3_ref, b3_ref,
                 w4_ref, b4_ref, o_ref, *, relu_out):
    """Fused 3-hidden-layer MLP. All activations stay in VMEM/vregs."""

    def linear(h, w_ref, b_ref):
        # w_ref: [D_out, D_in]; contract last dims of both operands -> h @ w.T
        # (MXU consumes the transposed operand directly; no transpose needed).
        acc = lax.dot_general(
            h, w_ref[...],
            dimension_numbers=(((1,), (1,)), ((), ())),
            preferred_element_type=jnp.float32)
        return acc + b_ref[...]

    h = x_ref[...].astype(jnp.float32)
    h = jnp.maximum(linear(h, w1_ref, b1_ref), 0.0)   # hidden1 + ReLU
    # Dropout(p=0.0) is the identity (eval semantics) -> no-op.
    h = jnp.maximum(linear(h, w2_ref, b2_ref), 0.0)   # hidden2 + ReLU
    h = jnp.maximum(linear(h, w3_ref, b3_ref), 0.0)   # hidden3 + ReLU
    out = linear(h, w4_ref, b4_ref)                   # output layer
    if relu_out:                                      # static Python bool
        out = jnp.maximum(out, 0.0)
    o_ref[...] = out.astype(o_ref.dtype)


@functools.partial(jax.jit, static_argnames=("relu_out",))
def objective_estimator_ann_3hidden(x, params, *, relu_out=False):
    """Forward pass of ObjectiveEstimator_ANN_3hidden_layer (dropout_ratio=0.0).

    x      : [batch, input_size]                       float32
    params : ((W1,b1),(W2,b2),(W3,b3),(W4,b4)) with Wi in PyTorch [out, in] layout
    returns: [batch, output_size]                      float32
    """
    (w1, b1), (w2, b2), (w3, b3), (w4, b4) = params
    B, D_in = x.shape
    H1, H2, H3, D_out = w1.shape[0], w2.shape[0], w3.shape[0], w4.shape[0]

    # --- lane-dense internal widths (multiples of 128); zero padding is exact ---
    H1p, H2p, H3p, Dp = (_round_up(d, 128) for d in (H1, H2, H3, D_out))

    def pad_w(w, rows, cols):
        return jnp.pad(w, ((0, rows - w.shape[0]), (0, cols - w.shape[1])))

    def pad_b(b, n):
        return jnp.pad(b, (0, n - b.shape[0])).reshape(1, n)

    w1p, b1p = pad_w(w1, H1p, D_in), pad_b(b1, H1p)
    w2p, b2p = pad_w(w2, H2p, H1p), pad_b(b2, H2p)
    w3p, b3p = pad_w(w3, H3p, H2p), pad_b(b3, H3p)
    w4p, b4p = pad_w(w4, Dp, H3p), pad_b(b4, Dp)

    # --- batch padding / tiling: sublane-multiple rows, big tiles, parallel grid ---
    tb = 512 if B > 512 else _round_up(B, 8)
    Bp = _round_up(B, tb)
    xp = jnp.pad(x, ((0, Bp - B), (0, 0))) if Bp != B else x
    grid = (Bp // tb,)

    kernel = functools.partial(_mlp3_kernel, relu_out=relu_out)
    full = lambda i: (0, 0)          # weights / biases: resident across all steps

    flops = 2 * Bp * (D_in * H1p + H1p * H2p + H2p * H3p + H3p * Dp)
    bytes_accessed = 4 * (Bp * D_in + Bp * Dp
                          + H1p * D_in + H2p * H1p + H3p * H2p + Dp * H3p
                          + H1p + H2p + H3p + Dp)

    out_padded = pl.pallas_call(
        kernel,
        out_shape=jax.ShapeDtypeStruct((Bp, Dp), x.dtype),
        grid=grid,
        in_specs=[
            pl.BlockSpec((tb, D_in), lambda i: (i, 0)),        # x tile (batch-tiled)
            pl.BlockSpec((H1p, D_in), full), pl.BlockSpec((1, H1p), full),
            pl.BlockSpec((H2p, H1p), full), pl.BlockSpec((1, H2p), full),
            pl.BlockSpec((H3p, H2p), full), pl.BlockSpec((1, H3p), full),
            pl.BlockSpec((Dp, H3p), full), pl.BlockSpec((1, Dp), full),
        ],
        out_specs=pl.BlockSpec((tb, Dp), lambda i: (i, 0)),    # lane-dense output
        compiler_params=pltpu.CompilerParams(
            dimension_semantics=("parallel",)),                # shard batch over TCs
        cost_estimate=pl.CostEstimate(
            flops=flops, transcendentals=0, bytes_accessed=bytes_accessed),
    )(xp, w1p, b1p, w2p, b2p, w3p, b3p, w4p, b4p)

    return out_padded[:B, :D_out]


def _ref_forward(x, params, relu_out=False):
    (w1, b1), (w2, b2), (w3, b3), (w4, b4) = params
    h = jnp.maximum(x @ w1.T + b1, 0.0)
    h = jnp.maximum(h @ w2.T + b2, 0.0)
    h = jnp.maximum(h @ w3.T + b3, 0.0)
    out = h @ w4.T + b4
    if relu_out:
        out = jnp.maximum(out, 0.0)
    return out


if __name__ == "__main__":
    # Small deterministic setup consistent with the module:
    #   input_size=32, hidden_sizes=[64, 48, 32], output_size=16, batch=8
    batch, input_size = 8, 32
    hidden_sizes = [64, 48, 32]
    output_size = 16

    key = jax.random.PRNGKey(0)
    kx, *kp = jax.random.split(key, 9)

    x = jax.random.normal(kx, (batch, input_size), dtype=jnp.float32)

    def init_linear(kw, kb, fan_in, fan_out):
        bound = 1.0 / (fan_in ** 0.5)           # torch.nn.Linear-style uniform init
        w = jax.random.uniform(kw, (fan_out, fan_in),
                               minval=-bound, maxval=bound, dtype=jnp.float32)
        b = jax.random.uniform(kb, (fan_out,),
                               minval=-bound, maxval=bound, dtype=jnp.float32)
        return w, b

    dims = [input_size] + hidden_sizes + [output_size]
    params = tuple(init_linear(kp[2 * i], kp[2 * i + 1], dims[i], dims[i + 1])
                   for i in range(4))

    # relu_out=False path (default of the module)
    out = jax.block_until_ready(objective_estimator_ann_3hidden(x, params))
    ref = _ref_forward(x, params, relu_out=False)
    assert out.shape == (batch, output_size)
    assert jnp.allclose(out, ref, atol=1e-5, rtol=1e-5)

    # relu_out=True path
    out_r = jax.block_until_ready(
        objective_estimator_ann_3hidden(x, params, relu_out=True))
    ref_r = _ref_forward(x, params, relu_out=True)
    assert jnp.allclose(out_r, ref_r, atol=1e-5, rtol=1e-5)

    print("KERNEL_OK")
</pallas_src>

<mosaic_0001>
module attributes {stable_mosaic.version = 11 : i64} {
  func.func @_mlp3_kernel(%arg0: i32, %arg1: memref<8x32xf32, #tpu.memory_space<vmem>>, %arg2: memref<128x32xf32, #tpu.memory_space<vmem>>, %arg3: memref<1x128xf32, #tpu.memory_space<vmem>>, %arg4: memref<128x128xf32, #tpu.memory_space<vmem>>, %arg5: memref<1x128xf32, #tpu.memory_space<vmem>>, %arg6: memref<128x128xf32, #tpu.memory_space<vmem>>, %arg7: memref<1x128xf32, #tpu.memory_space<vmem>>, %arg8: memref<128x128xf32, #tpu.memory_space<vmem>>, %arg9: memref<1x128xf32, #tpu.memory_space<vmem>>, %arg10: memref<8x128xf32, #tpu.memory_space<vmem>>) attributes {dimension_semantics = [#tpu.dimension_semantics<parallel>], iteration_bounds = array<i64: 1>, scalar_prefetch = 0 : i64, scratch_operands = 0 : i64, tpu.core_type = #tpu.core_type<tc>, window_params = [{transform_indices = @transform_0, window_bounds = array<i64: 8, 32>}, {pipeline_mode = #tpu.pipeline_mode<synchronous>, transform_indices = @transform_1, window_bounds = array<i64: 128, 32>}, {pipeline_mode = #tpu.pipeline_mode<synchronous>, transform_indices = @transform_2, window_bounds = array<i64: 1, 128>}, {pipeline_mode = #tpu.pipeline_mode<synchronous>, transform_indices = @transform_3, window_bounds = array<i64: 128, 128>}, {pipeline_mode = #tpu.pipeline_mode<synchronous>, transform_indices = @transform_4, window_bounds = array<i64: 1, 128>}, {pipeline_mode = #tpu.pipeline_mode<synchronous>, transform_indices = @transform_5, window_bounds = array<i64: 128, 128>}, {pipeline_mode = #tpu.pipeline_mode<synchronous>, transform_indices = @transform_6, window_bounds = array<i64: 1, 128>}, {pipeline_mode = #tpu.pipeline_mode<synchronous>, transform_indices = @transform_7, window_bounds = array<i64: 128, 128>}, {pipeline_mode = #tpu.pipeline_mode<synchronous>, transform_indices = @transform_8, window_bounds = array<i64: 1, 128>}, {transform_indices = @transform_9, window_bounds = array<i64: 8, 128>}]} {
    %c0 = arith.constant 0 : index
    %c0_0 = arith.constant 0 : index
    %0 = vector.load %arg1[%c0, %c0_0] : memref<8x32xf32, #tpu.memory_space<vmem>>, vector<8x32xf32>
    %c0_1 = arith.constant 0 : index
    %c0_2 = arith.constant 0 : index
    %1 = vector.load %arg2[%c0_1, %c0_2] : memref<128x32xf32, #tpu.memory_space<vmem>>, vector<128x32xf32>
    %cst = arith.constant dense<0.000000e+00> : vector<8x128xf32>
    %2 = tpu.matmul %0, %1, %cst {dimension_numbers = #tpu.dot_dimension_numbers<[1], [1], [0], [0], [0, 0, 1, 0], [], []>} : vector<8x32xf32>, vector<128x32xf32>, vector<8x128xf32> -> vector<8x128xf32>
    %c0_3 = arith.constant 0 : index
    %c0_4 = arith.constant 0 : index
    %3 = vector.load %arg3[%c0_3, %c0_4] : memref<1x128xf32, #tpu.memory_space<vmem>>, vector<1x128xf32>
    %4 = vector.broadcast %3 : vector<1x128xf32> to vector<8x128xf32>
    %5 = arith.addf %2, %4 : vector<8x128xf32>
    %cst_5 = arith.constant 0.000000e+00 : f32
    %6 = vector.broadcast %cst_5 : f32 to vector<8x128xf32>
    %7 = arith.maximumf %5, %6 : vector<8x128xf32>
    %c0_6 = arith.constant 0 : index
    %c0_7 = arith.constant 0 : index
    %8 = vector.load %arg4[%c0_6, %c0_7] : memref<128x128xf32, #tpu.memory_space<vmem>>, vector<128x128xf32>
    %cst_8 = arith.constant dense<0.000000e+00> : vector<8x128xf32>
    %9 = tpu.matmul %7, %8, %cst_8 {dimension_numbers = #tpu.dot_dimension_numbers<[1], [1], [0], [0], [0, 0, 1, 0], [], []>} : vector<8x128xf32>, vector<128x128xf32>, vector<8x128xf32> -> vector<8x128xf32>
    %c0_9 = arith.constant 0 : index
    %c0_10 = arith.constant 0 : index
    %10 = vector.load %arg5[%c0_9, %c0_10] : memref<1x128xf32, #tpu.memory_space<vmem>>, vector<1x128xf32>
    %11 = vector.broadcast %10 : vector<1x128xf32> to vector<8x128xf32>
    %12 = arith.addf %9, %11 : vector<8x128xf32>
    %cst_11 = arith.constant 0.000000e+00 : f32
    %13 = vector.broadcast %cst_11 : f32 to vector<8x128xf32>
    %14 = arith.maximumf %12, %13 : vector<8x128xf32>
    %c0_12 = arith.constant 0 : index
    %c0_13 = arith.constant 0 : index
    %15 = vector.load %arg6[%c0_12, %c0_13] : memref<128x128xf32, #tpu.memory_space<vmem>>, vector<128x128xf32>
    %cst_14 = arith.constant dense<0.000000e+00> : vector<8x128xf32>
    %16 = tpu.matmul %14, %15, %cst_14 {dimension_numbers = #tpu.dot_dimension_numbers<[1], [1], [0], [0], [0, 0, 1, 0], [], []>} : vector<8x128xf32>, vector<128x128xf32>, vector<8x128xf32> -> vector<8x128xf32>
    %c0_15 = arith.constant 0 : index
    %c0_16 = arith.constant 0 : index
    %17 = vector.load %arg7[%c0_15, %c0_16] : memref<1x128xf32, #tpu.memory_space<vmem>>, vector<1x128xf32>
    %18 = vector.broadcast %17 : vector<1x128xf32> to vector<8x128xf32>
    %19 = arith.addf %16, %18 : vector<8x128xf32>
    %cst_17 = arith.constant 0.000000e+00 : f32
    %20 = vector.broadcast %cst_17 : f32 to vector<8x128xf32>
    %21 = arith.maximumf %19, %20 : vector<8x128xf32>
    %c0_18 = arith.constant 0 : index
    %c0_19 = arith.constant 0 : index
    %22 = vector.load %arg8[%c0_18, %c0_19] : memref<128x128xf32, #tpu.memory_space<vmem>>, vector<128x128xf32>
    %cst_20 = arith.constant dense<0.000000e+00> : vector<8x128xf32>
    %23 = tpu.matmul %21, %22, %cst_20 {dimension_numbers = #tpu.dot_dimension_numbers<[1], [1], [0], [0], [0, 0, 1, 0], [], []>} : vector<8x128xf32>, vector<128x128xf32>, vector<8x128xf32> -> vector<8x128xf32>
    %c0_21 = arith.constant 0 : index
    %c0_22 = arith.constant 0 : index
    %24 = vector.load %arg9[%c0_21, %c0_22] : memref<1x128xf32, #tpu.memory_space<vmem>>, vector<1x128xf32>
    %25 = vector.broadcast %24 : vector<1x128xf32> to vector<8x128xf32>
    %26 = arith.addf %23, %25 : vector<8x128xf32>
    %c0_23 = arith.constant 0 : index
    %c0_24 = arith.constant 0 : index
    %27 = vector.load %arg10[%c0_23, %c0_24] : memref<8x128xf32, #tpu.memory_space<vmem>>, vector<8x128xf32>
    tpu.vector_store %arg10[%c0_23, %c0_24], %26 {strides = array<i32>} : memref<8x128xf32, #tpu.memory_space<vmem>>, vector<8x128xf32>,
    return
  }
  func.func @transform_0(%arg0: i32) -> (i32, i32) {
    %c0_i32 = arith.constant 0 : i32
    %c0_i32_0 = arith.constant 0 : i32
    return %arg0, %c0_i32 : i32, i32
  }
  func.func @transform_1(%arg0: i32) -> (i32, i32) {
    %c0_i32 = arith.constant 0 : i32
    %c0_i32_0 = arith.constant 0 : i32
    %c0_i32_1 = arith.constant 0 : i32
    return %c0_i32, %c0_i32_0 : i32, i32
  }
  func.func @transform_2(%arg0: i32) -> (i32, i32) {
    %c0_i32 = arith.constant 0 : i32
    %c0_i32_0 = arith.constant 0 : i32
    %c0_i32_1 = arith.constant 0 : i32
    return %c0_i32, %c0_i32_0 : i32, i32
  }
  func.func @transform_3(%arg0: i32) -> (i32, i32) {
    %c0_i32 = arith.constant 0 : i32
    %c0_i32_0 = arith.constant 0 : i32
    %c0_i32_1 = arith.constant 0 : i32
    return %c0_i32, %c0_i32_0 : i32, i32
  }
  func.func @transform_4(%arg0: i32) -> (i32, i32) {
    %c0_i32 = arith.constant 0 : i32
    %c0_i32_0 = arith.constant 0 : i32
    %c0_i32_1 = arith.constant 0 : i32
    return %c0_i32, %c0_i32_0 : i32, i32
  }
  func.func @transform_5(%arg0: i32) -> (i32, i32) {
    %c0_i32 = arith.constant 0 : i32
    %c0_i32_0 = arith.constant 0 : i32
    %c0_i32_1 = arith.constant 0 : i32
    return %c0_i32, %c0_i32_0 : i32, i32
  }
  func.func @transform_6(%arg0: i32) -> (i32, i32) {
    %c0_i32 = arith.constant 0 : i32
    %c0_i32_0 = arith.constant 0 : i32
    %c0_i32_1 = arith.constant 0 : i32
    return %c0_i32, %c0_i32_0 : i32, i32
  }
  func.func @transform_7(%arg0: i32) -> (i32, i32) {
    %c0_i32 = arith.constant 0 : i32
    %c0_i32_0 = arith.constant 0 : i32
    %c0_i32_1 = arith.constant 0 : i32
    return %c0_i32, %c0_i32_0 : i32, i32
  }
  func.func @transform_8(%arg0: i32) -> (i32, i32) {
    %c0_i32 = arith.constant 0 : i32
    %c0_i32_0 = arith.constant 0 : i32
    %c0_i32_1 = arith.constant 0 : i32
    return %c0_i32, %c0_i32_0 : i32, i32
  }
  func.func @transform_9(%arg0: i32) -> (i32, i32) {
    %c0_i32 = arith.constant 0 : i32
    %c0_i32_0 = arith.constant 0 : i32
    return %arg0, %c0_i32 : i32, i32
  }
}

</mosaic_0001>

<llo_original>
// kernel: objective_estimator_ann_3hidden.1
$region0: #{objective_estimator_ann_3hidden.1}
  #allocation0 [shape = 'u32[]', space=smem, size = 0x4, offset = 0x4, fixed_abs, tag = 'smem constant byte address 0x4 - core index']
  #allocation1 [shape = 'u32[144,128]{1,0:T(1,128)}', space=vmem, size = 0x12000, scoped, tag = 'internal scratch']
  %s0 = inlined_call_operand.vmem [shape: f32[8,32], index: 0, kind: input, shape index: {}]
  %s1 = inlined_call_operand.vmem [shape: f32[128,32], index: 1, kind: input, shape index: {}]
  %s2 = inlined_call_operand.vmem [shape: f32[1,128], index: 2, kind: input, shape index: {}]
  %s3 = inlined_call_operand.vmem [shape: f32[128,128], index: 3, kind: input, shape index: {}]
  %s4 = inlined_call_operand.vmem [shape: f32[1,128], index: 4, kind: input, shape index: {}]
  %s5 = inlined_call_operand.vmem [shape: f32[128,128], index: 5, kind: input, shape index: {}]
  %s6 = inlined_call_operand.vmem [shape: f32[1,128], index: 6, kind: input, shape index: {}]
  %s7 = inlined_call_operand.vmem [shape: f32[128,128], index: 7, kind: input, shape index: {}]
  %s8 = inlined_call_operand.vmem [shape: f32[1,128], index: 8, kind: input, shape index: {}]
  %s9 = inlined_call_operand.hbm [shape: f32[8,128], index: 9, kind: output, shape index: {}]
  %s10 = sld [smem:[#allocation0]]
  $region46: #{objective_estimator_ann_3hidden.1} parent=0
    _
  %s12 = ssub.s32 1, %s10
  %s13 = scalar_select 0, %s12, %s10
  $region1: #{objective_estimator_ann_3hidden.1} parent=0
    #allocation2 [shape = 'u8[4096]{0}', space=vmem, size = 0x1000, scoped, tag = 'output window, operand 0, single buffered']
    #allocation3 [shape = 's32[1]{0}', space=sflag, size = 0x4, scoped, tag = 'scoped memory for objective_estimator_ann_3hidden.1']
    %14 = vsyncpa [#allocation3], 0
    // Predicated region
    $region2: #{objective_estimator_ann_3hidden.1} parent=1 // pred_check
      _
    $region3: #{objective_estimator_ann_3hidden.1} parent=1 // pred_check_branch
      %16 = sbr.rel (0) target = $region5
    $region4: #{objective_estimator_ann_3hidden.1} parent=1 // pred_region
      _
    $region5: #{objective_estimator_ann_3hidden.1} parent=1 // pred_fallthru
      _
    // Predicated region
    $region6: #{objective_estimator_ann_3hidden.1} parent=1 // pred_check
      _
    $region7: #{objective_estimator_ann_3hidden.1} parent=1 // pred_check_branch
      %18 = sbr.rel (0) target = $region9
    $region8: #{objective_estimator_ann_3hidden.1} parent=1 // pred_region
      _
    $region9: #{objective_estimator_ann_3hidden.1} parent=1 // pred_fallthru
      _
    // Predicated region
    $region10: #{objective_estimator_ann_3hidden.1} parent=1 // pred_check
      _
    $region11: #{objective_estimator_ann_3hidden.1} parent=1 // pred_check_branch
      %20 = sbr.rel (0) target = $region13
    $region12: #{objective_estimator_ann_3hidden.1} parent=1 // pred_region
      _
    $region13: #{objective_estimator_ann_3hidden.1} parent=1 // pred_fallthru
      _
    // Predicated region
    $region14: #{objective_estimator_ann_3hidden.1} parent=1 // pred_check
      _
    $region15: #{objective_estimator_ann_3hidden.1} parent=1 // pred_check_branch
      %22 = sbr.rel (0) target = $region17
    $region16: #{objective_estimator_ann_3hidden.1} parent=1 // pred_region
      _
    $region17: #{objective_estimator_ann_3hidden.1} parent=1 // pred_fallthru
      _
    // Predicated region
    $region18: #{objective_estimator_ann_3hidden.1} parent=1 // pred_check
      _
    $region19: #{objective_estimator_ann_3hidden.1} parent=1 // pred_check_branch
      %24 = sbr.rel (0) target = $region21
    $region20: #{objective_estimator_ann_3hidden.1} parent=1 // pred_region
      _
    $region21: #{objective_estimator_ann_3hidden.1} parent=1 // pred_fallthru
      _
    // Predicated region
    $region22: #{objective_estimator_ann_3hidden.1} parent=1 // pred_check
      _
    $region23: #{objective_estimator_ann_3hidden.1} parent=1 // pred_check_branch
      %26 = sbr.rel (0) target = $region25
    $region24: #{objective_estimator_ann_3hidden.1} parent=1 // pred_region
      _
    $region25: #{objective_estimator_ann_3hidden.1} parent=1 // pred_fallthru
      _
    // Predicated region
    $region26: #{objective_estimator_ann_3hidden.1} parent=1 // pred_check
      _
    $region27: #{objective_estimator_ann_3hidden.1} parent=1 // pred_check_branch
      %28 = sbr.rel (0) target = $region29
    $region28: #{objective_estimator_ann_3hidden.1} parent=1 // pred_region
      _
    $region29: #{objective_estimator_ann_3hidden.1} parent=1 // pred_fallthru
      _
    // Predicated region
    $region30: #{objective_estimator_ann_3hidden.1} parent=1 // pred_check
      _
    $region31: #{objective_estimator_ann_3hidden.1} parent=1 // pred_check_branch
      %30 = sbr.rel (0) target = $region33
    $region32: #{objective_estimator_ann_3hidden.1} parent=1 // pred_region
      _
    $region33: #{objective_estimator_ann_3hidden.1} parent=1 // pred_fallthru
      _
    // Predicated region
    $region34: #{objective_estimator_ann_3hidden.1} parent=1 // pred_check
      _
    $region35: #{objective_estimator_ann_3hidden.1} parent=1 // pred_check_branch
      %32 = sbr.rel (0) target = $region37
    $region36: #{objective_estimator_ann_3hidden.1} parent=1 // pred_region
      _
    $region37: #{objective_estimator_ann_3hidden.1} parent=1 // pred_fallthru
      _
    %v33 = vld [vmem:[%s0] sm:$0xff]
    %v34 = vld [vmem:[%s1] sm:$0xff]
    %v35 = vld [vmem:[%s1 + $0x8] sm:$0xff]
    %v36 = vld [vmem:[%s1 + $0x10] sm:$0xff]
    %v37 = vld [vmem:[%s1 + $0x18] sm:$0xff]
    %v38 = vld [vmem:[%s1 + $0x20] sm:$0xff]
    %v39 = vld [vmem:[%s1 + $0x28] sm:$0xff]
    %v40 = vld [vmem:[%s1 + $0x30] sm:$0xff]
    %v41 = vld [vmem:[%s1 + $0x38] sm:$0xff]
    %v42 = vld [vmem:[%s1 + $0x40] sm:$0xff]
    %v43 = vld [vmem:[%s1 + $0x48] sm:$0xff]
    %v44 = vld [vmem:[%s1 + $0x50] sm:$0xff]
    %v45 = vld [vmem:[%s1 + $0x58] sm:$0xff]
    %v46 = vld [vmem:[%s1 + $0x60] sm:$0xff]
    %v47 = vld [vmem:[%s1 + $0x68] sm:$0xff]
    %v48 = vld [vmem:[%s1 + $0x70] sm:$0xff]
    %v49 = vld [vmem:[%s1 + $0x78] sm:$0xff]
    %v50 = vld [vmem:[%s2] sm:$0x1]
    %v52 = vlaneseq
    %v53 = vshrl.u32 %v52, 7
    %v54 = vsub.s32 0, %v53
    %v55 = vrot.slane %v50, %v54
    %vm57 = vcmask 261120
    %v59 = vsel %vm57, %v33, 0
    %v62 = vsel %vm57, %v34, 0
    %v65 = vsel %vm57, %v35, 0
    %v68 = vsel %vm57, %v36, 0
    %v71 = vsel %vm57, %v37, 0
    %v74 = vsel %vm57, %v38, 0
    %v77 = vsel %vm57, %v39, 0
    %v80 = vsel %vm57, %v40, 0
    %v83 = vsel %vm57, %v41, 0
    %v86 = vsel %vm57, %v42, 0
    %v89 = vsel %vm57, %v43, 0
    %v92 = vsel %vm57, %v44, 0
    %v95 = vsel %vm57, %v45, 0
    %v98 = vsel %vm57, %v46, 0
    %v101 = vsel %vm57, %v47, 0
    %v104 = vsel %vm57, %v48, 0
    %v107 = vsel %vm57, %v49, 0
    %109 = vmatprep.subr.mxu0 0.0
    %110 = vmatpush1.xpose.msra.mxu0 %v107
    %111 = vmatprep.subr.mxu0 0.0
    %112 = vmatpush1.xpose.msra.mxu0 %v104
    %113 = vmatprep.subr.mxu0 0.0
    %114 = vmatpush1.xpose.msra.mxu0 %v101
    %115 = vmatprep.subr.mxu0 0.0
    %116 = vmatpush1.xpose.msra.mxu0 %v98
    %117 = vmatprep.subr.mxu0 0.0
    %118 = vmatpush1.xpose.msra.mxu0 %v95
    %119 = vmatprep.subr.mxu0 0.0
    %120 = vmatpush1.xpose.msra.mxu0 %v92
    %121 = vmatprep.subr.mxu0 0.0
    %122 = vmatpush1.xpose.msra.mxu0 %v89
    %123 = vmatprep.subr.mxu0 0.0
    %124 = vmatpush1.xpose.msra.mxu0 %v86
    %125 = vmatprep.subr.mxu0 0.0
    %126 = vmatpush1.xpose.msra.mxu0 %v83
    %127 = vmatprep.subr.mxu0 0.0
    %128 = vmatpush1.xpose.msra.mxu0 %v80
    %129 = vmatprep.subr.mxu0 0.0
    %130 = vmatpush1.xpose.msra.mxu0 %v77
    %131 = vmatprep.subr.mxu0 0.0
    %132 = vmatpush1.xpose.msra.mxu0 %v74
    %133 = vmatprep.subr.mxu0 0.0
    %134 = vmatpush1.xpose.msra.mxu0 %v71
    %135 = vmatprep.subr.mxu0 0.0
    %136 = vmatpush1.xpose.msra.mxu0 %v68
    %137 = vmatprep.subr.mxu0 0.0
    %138 = vmatpush1.xpose.msra.mxu0 %v65
    %139 = vmatprep.subr.mxu0 0.0
    %140 = vmatpush1.xpose.msra.mxu0 %v62
    %141 = vmatprep.subr.mxu0 0.0
    %142 = vmatpush2.xpose.msra.mxu0 0.0
    %143 = vmatprep.subr.mxu0 0.0
    %144 = vmatpush2.xpose.msra.mxu0 0.0
    %145 = vmatprep.subr.mxu0 0.0
    %146 = vmatpush2.xpose.msra.mxu0 0.0
    %147 = vmatprep.subr.mxu0 0.0
    %148 = vmatpush2.xpose.msra.mxu0 0.0
    %149 = vmatprep.subr.mxu0 0.0
    %150 = vmatpush2.xpose.msra.mxu0 0.0
    %151 = vmatprep.subr.mxu0 0.0
    %152 = vmatpush2.xpose.msra.mxu0 0.0
    %153 = vmatprep.subr.mxu0 0.0
    %154 = vmatpush2.xpose.msra.mxu0 0.0
    %155 = vmatprep.subr.mxu0 0.0
    %156 = vmatpush2.xpose.msra.mxu0 0.0
    %157 = vmatprep.subr.mxu0 0.0
    %158 = vmatpush2.xpose.msra.mxu0 0.0
    %159 = vmatprep.subr.mxu0 0.0
    %160 = vmatpush2.xpose.msra.mxu0 0.0
    %161 = vmatprep.subr.mxu0 0.0
    %162 = vmatpush2.xpose.msra.mxu0 0.0
    %163 = vmatprep.subr.mxu0 0.0
    %164 = vmatpush2.xpose.msra.mxu0 0.0
    %165 = vmatprep.subr.mxu0 0.0
    %166 = vmatpush2.xpose.msra.mxu0 0.0
    %167 = vmatprep.subr.mxu0 0.0
    %168 = vmatpush2.xpose.msra.mxu0 0.0
    %169 = vmatprep.subr.mxu0 0.0
    %170 = vmatpush2.xpose.msra.mxu0 0.0
    %171 = vmatprep.subr.mxu0 0.0
    %172 = vmatpush2.xpose.msra.mxu0 0.0
    %173 = vmatprep.mubr.f32.mxu0 0.0
    %174 = vmatmul.mubr.f32.gmra.mxu0 %v59
    %v175 = vpop.f32.mrf.mxu0
    %v176 = vadd.f32 %v55, %v175
    %v177 = vpop.f32.mrf.mxu0
    %178 = vdwg.mxu0
    %v179 = vmax.f32 %v176, 0.0
    %v180 = vld [vmem:[%s3] sm:$0xff]
    %v181 = vld [vmem:[%s3 + $0x8] sm:$0xff]
    %v182 = vld [vmem:[%s3 + $0x10] sm:$0xff]
    %v183 = vld [vmem:[%s3 + $0x18] sm:$0xff]
    %v184 = vld [vmem:[%s3 + $0x20] sm:$0xff]
    %v185 = vld [vmem:[%s3 + $0x28] sm:$0xff]
    %v186 = vld [vmem:[%s3 + $0x30] sm:$0xff]
    %v187 = vld [vmem:[%s3 + $0x38] sm:$0xff]
    %v188 = vld [vmem:[%s3 + $0x40] sm:$0xff]
    %v189 = vld [vmem:[%s3 + $0x48] sm:$0xff]
    %v190 = vld [vmem:[%s3 + $0x50] sm:$0xff]
    %v191 = vld [vmem:[%s3 + $0x58] sm:$0xff]
    %v192 = vld [vmem:[%s3 + $0x60] sm:$0xff]
    %v193 = vld [vmem:[%s3 + $0x68] sm:$0xff]
    %v194 = vld [vmem:[%s3 + $0x70] sm:$0xff]
    %v195 = vld [vmem:[%s3 + $0x78] sm:$0xff]
    %v196 = vld [vmem:[%s4] sm:$0x1]
    %v198 = vlaneseq
    %v199 = vshrl.u32 %v198, 7
    %v200 = vsub.s32 0, %v199
    %v201 = vrot.slane %v196, %v200
    %203 = vmatprep.subr.mxu0 0.0
    %204 = vmatpush1.xpose.msra.mxu0 %v195
    %205 = vmatprep.subr.mxu0 0.0
    %206 = vmatpush1.xpose.msra.mxu0 %v194
    %207 = vmatprep.subr.mxu0 0.0
    %208 = vmatpush1.xpose.msra.mxu0 %v193
    %209 = vmatprep.subr.mxu0 0.0
    %210 = vmatpush1.xpose.msra.mxu0 %v192
    %211 = vmatprep.subr.mxu0 0.0
    %212 = vmatpush1.xpose.msra.mxu0 %v191
    %213 = vmatprep.subr.mxu0 0.0
    %214 = vmatpush1.xpose.msra.mxu0 %v190
    %215 = vmatprep.subr.mxu0 0.0
    %216 = vmatpush1.xpose.msra.mxu0 %v189
    %217 = vmatprep.subr.mxu0 0.0
    %218 = vmatpush1.xpose.msra.mxu0 %v188
    %219 = vmatprep.subr.mxu0 0.0
    %220 = vmatpush1.xpose.msra.mxu0 %v187
    %221 = vmatprep.subr.mxu0 0.0
    %222 = vmatpush1.xpose.msra.mxu0 %v186
    %223 = vmatprep.subr.mxu0 0.0
    %224 = vmatpush1.xpose.msra.mxu0 %v185
    %225 = vmatprep.subr.mxu0 0.0
    %226 = vmatpush1.xpose.msra.mxu0 %v184
    %227 = vmatprep.subr.mxu0 0.0
    %228 = vmatpush1.xpose.msra.mxu0 %v183
    %229 = vmatprep.subr.mxu0 0.0
    %230 = vmatpush1.xpose.msra.mxu0 %v182
    %231 = vmatprep.subr.mxu0 0.0
    %232 = vmatpush1.xpose.msra.mxu0 %v181
    %233 = vmatprep.subr.mxu0 0.0
    %234 = vmatpush1.xpose.msra.mxu0 %v180
    %235 = vmatprep.subr.mxu0 0.0
    %236 = vmatpush2.xpose.msra.mxu0 0.0
    %237 = vmatprep.subr.mxu0 0.0
    %238 = vmatpush2.xpose.msra.mxu0 0.0
    %239 = vmatprep.subr.mxu0 0.0
    %240 = vmatpush2.xpose.msra.mxu0 0.0
    %241 = vmatprep.subr.mxu0 0.0
    %242 = vmatpush2.xpose.msra.mxu0 0.0
    %243 = vmatprep.subr.mxu0 0.0
    %244 = vmatpush2.xpose.msra.mxu0 0.0
    %245 = vmatprep.subr.mxu0 0.0
    %246 = vmatpush2.xpose.msra.mxu0 0.0
    %247 = vmatprep.subr.mxu0 0.0
    %248 = vmatpush2.xpose.msra.mxu0 0.0
    %249 = vmatprep.subr.mxu0 0.0
    %250 = vmatpush2.xpose.msra.mxu0 0.0
    %251 = vmatprep.subr.mxu0 0.0
    %252 = vmatpush2.xpose.msra.mxu0 0.0
    %253 = vmatprep.subr.mxu0 0.0
    %254 = vmatpush2.xpose.msra.mxu0 0.0
    %255 = vmatprep.subr.mxu0 0.0
    %256 = vmatpush2.xpose.msra.mxu0 0.0
    %257 = vmatprep.subr.mxu0 0.0
    %258 = vmatpush2.xpose.msra.mxu0 0.0
    %259 = vmatprep.subr.mxu0 0.0
    %260 = vmatpush2.xpose.msra.mxu0 0.0
    %261 = vmatprep.subr.mxu0 0.0
    %262 = vmatpush2.xpose.msra.mxu0 0.0
    %263 = vmatprep.subr.mxu0 0.0
    %264 = vmatpush2.xpose.msra.mxu0 0.0
    %265 = vmatprep.subr.mxu0 0.0
    %266 = vmatpush2.xpose.msra.mxu0 0.0
    %267 = vmatprep.mubr.f32.mxu0 0.0
    %268 = vmatmul.mubr.f32.gmra.mxu0 %v179
    %v269 = vpop.f32.mrf.mxu0
    %v270 = vadd.f32 %v201, %v269
    %v271 = vpop.f32.mrf.mxu0
    %272 = vdwg.mxu0
    %v273 = vmax.f32 %v270, 0.0
    %v274 = vld [vmem:[%s5] sm:$0xff]
    %v275 = vld [vmem:[%s5 + $0x8] sm:$0xff]
    %v276 = vld [vmem:[%s5 + $0x10] sm:$0xff]
    %v277 = vld [vmem:[%s5 + $0x18] sm:$0xff]
    %v278 = vld [vmem:[%s5 + $0x20] sm:$0xff]
    %v279 = vld [vmem:[%s5 + $0x28] sm:$0xff]
    %v280 = vld [vmem:[%s5 + $0x30] sm:$0xff]
    %v281 = vld [vmem:[%s5 + $0x38] sm:$0xff]
    %v282 = vld [vmem:[%s5 + $0x40] sm:$0xff]
    %v283 = vld [vmem:[%s5 + $0x48] sm:$0xff]
    %v284 = vld [vmem:[%s5 + $0x50] sm:$0xff]
    %v285 = vld [vmem:[%s5 + $0x58] sm:$0xff]
    %v286 = vld [vmem:[%s5 + $0x60] sm:$0xff]
    %v287 = vld [vmem:[%s5 + $0x68] sm:$0xff]
    %v288 = vld [vmem:[%s5 + $0x70] sm:$0xff]
    %v289 = vld [vmem:[%s5 + $0x78] sm:$0xff]
    %v290 = vld [vmem:[%s6] sm:$0x1]
    %v292 = vlaneseq
    %v293 = vshrl.u32 %v292, 7
    %v294 = vsub.s32 0, %v293
    %v295 = vrot.slane %v290, %v294
    %297 = vmatprep.subr.mxu0 0.0
    %298 = vmatpush1.xpose.msra.mxu0 %v289
    %299 = vmatprep.subr.mxu0 0.0
    %300 = vmatpush1.xpose.msra.mxu0 %v288
    %301 = vmatprep.subr.mxu0 0.0
    %302 = vmatpush1.xpose.msra.mxu0 %v287
    %303 = vmatprep.subr.mxu0 0.0
    %304 = vmatpush1.xpose.msra.mxu0 %v286
    %305 = vmatprep.subr.mxu0 0.0
    %306 = vmatpush1.xpose.msra.mxu0 %v285
    %307 = vmatprep.subr.mxu0 0.0
    %308 = vmatpush1.xpose.msra.mxu0 %v284
    %309 = vmatprep.subr.mxu0 0.0
    %310 = vmatpush1.xpose.msra.mxu0 %v283
    %311 = vmatprep.subr.mxu0 0.0
    %312 = vmatpush1.xpose.msra.mxu0 %v282
    %313 = vmatprep.subr.mxu0 0.0
    %314 = vmatpush1.xpose.msra.mxu0 %v281
    %315 = vmatprep.subr.mxu0 0.0
    %316 = vmatpush1.xpose.msra.mxu0 %v280
    %317 = vmatprep.subr.mxu0 0.0
    %318 = vmatpush1.xpose.msra.mxu0 %v279
    %319 = vmatprep.subr.mxu0 0.0
    %320 = vmatpush1.xpose.msra.mxu0 %v278
    %321 = vmatprep.subr.mxu0 0.0
    %322 = vmatpush1.xpose.msra.mxu0 %v277
    %323 = vmatprep.subr.mxu0 0.0
    %324 = vmatpush1.xpose.msra.mxu0 %v276
    %325 = vmatprep.subr.mxu0 0.0
    %326 = vmatpush1.xpose.msra.mxu0 %v275
    %327 = vmatprep.subr.mxu0 0.0
    %328 = vmatpush1.xpose.msra.mxu0 %v274
    %329 = vmatprep.subr.mxu0 0.0
    %330 = vmatpush2.xpose.msra.mxu0 0.0
    %331 = vmatprep.subr.mxu0 0.0
    %332 = vmatpush2.xpose.msra.mxu0 0.0
    %333 = vmatprep.subr.mxu0 0.0
    %334 = vmatpush2.xpose.msra.mxu0 0.0
    %335 = vmatprep.subr.mxu0 0.0
    %336 = vmatpush2.xpose.msra.mxu0 0.0
    %337 = vmatprep.subr.mxu0 0.0
    %338 = vmatpush2.xpose.msra.mxu0 0.0
    %339 = vmatprep.subr.mxu0 0.0
    %340 = vmatpush2.xpose.msra.mxu0 0.0
    %341 = vmatprep.subr.mxu0 0.0
    %342 = vmatpush2.xpose.msra.mxu0 0.0
    %343 = vmatprep.subr.mxu0 0.0
    %344 = vmatpush2.xpose.msra.mxu0 0.0
    %345 = vmatprep.subr.mxu0 0.0
    %346 = vmatpush2.xpose.msra.mxu0 0.0
    %347 = vmatprep.subr.mxu0 0.0
    %348 = vmatpush2.xpose.msra.mxu0 0.0
    %349 = vmatprep.subr.mxu0 0.0
    %350 = vmatpush2.xpose.msra.mxu0 0.0
    %351 = vmatprep.subr.mxu0 0.0
    %352 = vmatpush2.xpose.msra.mxu0 0.0
    %353 = vmatprep.subr.mxu0 0.0
    %354 = vmatpush2.xpose.msra.mxu0 0.0
    %355 = vmatprep.subr.mxu0 0.0
    %356 = vmatpush2.xpose.msra.mxu0 0.0
    %357 = vmatprep.subr.mxu0 0.0
    %358 = vmatpush2.xpose.msra.mxu0 0.0
    %359 = vmatprep.subr.mxu0 0.0
    %360 = vmatpush2.xpose.msra.mxu0 0.0
    %361 = vmatprep.mubr.f32.mxu0 0.0
    %362 = vmatmul.mubr.f32.gmra.mxu0 %v273
    %v363 = vpop.f32.mrf.mxu0
    %v364 = vadd.f32 %v295, %v363
    %v365 = vpop.f32.mrf.mxu0
    %366 = vdwg.mxu0
    %v367 = vmax.f32 %v364, 0.0
    %v368 = vld [vmem:[%s7] sm:$0xff]
    %v369 = vld [vmem:[%s7 + $0x8] sm:$0xff]
    %v370 = vld [vmem:[%s7 + $0x10] sm:$0xff]
    %v371 = vld [vmem:[%s7 + $0x18] sm:$0xff]
    %v372 = vld [vmem:[%s7 + $0x20] sm:$0xff]
    %v373 = vld [vmem:[%s7 + $0x28] sm:$0xff]
    %v374 = vld [vmem:[%s7 + $0x30] sm:$0xff]
    %v375 = vld [vmem:[%s7 + $0x38] sm:$0xff]
    %v376 = vld [vmem:[%s7 + $0x40] sm:$0xff]
    %v377 = vld [vmem:[%s7 + $0x48] sm:$0xff]
    %v378 = vld [vmem:[%s7 + $0x50] sm:$0xff]
    %v379 = vld [vmem:[%s7 + $0x58] sm:$0xff]
    %v380 = vld [vmem:[%s7 + $0x60] sm:$0xff]
    %v381 = vld [vmem:[%s7 + $0x68] sm:$0xff]
    %v382 = vld [vmem:[%s7 + $0x70] sm:$0xff]
    %v383 = vld [vmem:[%s7 + $0x78] sm:$0xff]
    %v384 = vld [vmem:[%s8] sm:$0x1]
    %v386 = vlaneseq
    %v387 = vshrl.u32 %v386, 7
    %v388 = vsub.s32 0, %v387
    %v389 = vrot.slane %v384, %v388
    %391 = vmatprep.subr.mxu0 0.0
    %392 = vmatpush1.xpose.msra.mxu0 %v383
    %393 = vmatprep.subr.mxu0 0.0
    %394 = vmatpush1.xpose.msra.mxu0 %v382
    %395 = vmatprep.subr.mxu0 0.0
    %396 = vmatpush1.xpose.msra.mxu0 %v381
    %397 = vmatprep.subr.mxu0 0.0
    %398 = vmatpush1.xpose.msra.mxu0 %v380
    %399 = vmatprep.subr.mxu0 0.0
    %400 = vmatpush1.xpose.msra.mxu0 %v379
    %401 = vmatprep.subr.mxu0 0.0
    %402 = vmatpush1.xpose.msra.mxu0 %v378
    %403 = vmatprep.subr.mxu0 0.0
    %404 = vmatpush1.xpose.msra.mxu0 %v377
    %405 = vmatprep.subr.mxu0 0.0
    %406 = vmatpush1.xpose.msra.mxu0 %v376
    %407 = vmatprep.subr.mxu0 0.0
    %408 = vmatpush1.xpose.msra.mxu0 %v375
    %409 = vmatprep.subr.mxu0 0.0
    %410 = vmatpush1.xpose.msra.mxu0 %v374
    %411 = vmatprep.subr.mxu0 0.0
    %412 = vmatpush1.xpose.msra.mxu0 %v373
    %413 = vmatprep.subr.mxu0 0.0
    %414 = vmatpush1.xpose.msra.mxu0 %v372
    %415 = vmatprep.subr.mxu0 0.0
    %416 = vmatpush1.xpose.msra.mxu0 %v371
    %417 = vmatprep.subr.mxu0 0.0
    %418 = vmatpush1.xpose.msra.mxu0 %v370
    %419 = vmatprep.subr.mxu0 0.0
    %420 = vmatpush1.xpose.msra.mxu0 %v369
    %421 = vmatprep.subr.mxu0 0.0
    %422 = vmatpush1.xpose.msra.mxu0 %v368
    %423 = vmatprep.subr.mxu0 0.0
    %424 = vmatpush2.xpose.msra.mxu0 0.0
    %425 = vmatprep.subr.mxu0 0.0
    %426 = vmatpush2.xpose.msra.mxu0 0.0
    %427 = vmatprep.subr.mxu0 0.0
    %428 = vmatpush2.xpose.msra.mxu0 0.0
    %429 = vmatprep.subr.mxu0 0.0
    %430 = vmatpush2.xpose.msra.mxu0 0.0
    %431 = vmatprep.subr.mxu0 0.0
    %432 = vmatpush2.xpose.msra.mxu0 0.0
    %433 = vmatprep.subr.mxu0 0.0
    %434 = vmatpush2.xpose.msra.mxu0 0.0
    %435 = vmatprep.subr.mxu0 0.0
    %436 = vmatpush2.xpose.msra.mxu0 0.0
    %437 = vmatprep.subr.mxu0 0.0
    %438 = vmatpush2.xpose.msra.mxu0 0.0
    %439 = vmatprep.subr.mxu0 0.0
    %440 = vmatpush2.xpose.msra.mxu0 0.0
    %441 = vmatprep.subr.mxu0 0.0
    %442 = vmatpush2.xpose.msra.mxu0 0.0
    %443 = vmatprep.subr.mxu0 0.0
    %444 = vmatpush2.xpose.msra.mxu0 0.0
    %445 = vmatprep.subr.mxu0 0.0
    %446 = vmatpush2.xpose.msra.mxu0 0.0
    %447 = vmatprep.subr.mxu0 0.0
    %448 = vmatpush2.xpose.msra.mxu0 0.0
    %449 = vmatprep.subr.mxu0 0.0
    %450 = vmatpush2.xpose.msra.mxu0 0.0
    %451 = vmatprep.subr.mxu0 0.0
    %452 = vmatpush2.xpose.msra.mxu0 0.0
    %453 = vmatprep.subr.mxu0 0.0
    %454 = vmatpush2.xpose.msra.mxu0 0.0
    %455 = vmatprep.mubr.f32.mxu0 0.0
    %456 = vmatmul.mubr.f32.gmra.mxu0 %v367
    %v457 = vpop.f32.mrf.mxu0
    %v458 = vadd.f32 %v389, %v457
    %v459 = vpop.f32.mrf.mxu0
    %460 = vdwg.mxu0
    %461 = vst [vmem:[#allocation2] sm:$0xff] %v458
    // Predicated region
    $region38: #{objective_estimator_ann_3hidden.1} parent=1 // pred_check
      _
    $region39: #{objective_estimator_ann_3hidden.1} parent=1 // pred_check_branch
      %463 = sbr.rel (0) target = $region41
    $region40: #{objective_estimator_ann_3hidden.1} parent=1 // pred_region
      %s465 = ssub.s32 128, 128
      %466 = vsyncadd [#allocation3], %s465
      %s468 = sshll.u32 [#allocation2], 4
      %s469 = int_to_ptr.vmem [resolvable:$true] %s468
      %471 = dma.vmem_to_hbm [thread:$0]  %s469, 128, %s9, [#allocation3]
    $region41: #{objective_estimator_ann_3hidden.1} parent=1 // pred_fallthru
      _
    // Predicated region
    $region42: #{objective_estimator_ann_3hidden.1} parent=1 // pred_check
      _
    $region43: #{objective_estimator_ann_3hidden.1} parent=1 // pred_check_branch
      %473 = sbr.rel (0) target = $region45
    $region44: #{objective_estimator_ann_3hidden.1} parent=1 // pred_region
      %474 = dma.done [#allocation3], 128
    $region45: #{objective_estimator_ann_3hidden.1} parent=1 // pred_fallthru
      _
    %475 = vsyncpa [#allocation3], 1

</llo_original>
